<compile_context>
chip_gen: v6e
topology: v6e:2x2x1
jax: 0.10.0
libtpu: 0.0.40
codegen_flags: <defaults>
</compile_context>

<pallas_src>
from functools import lru_cache

import numpy as np
import jax
import jax.numpy as jnp
from jax.experimental import pallas as pl
from jax.experimental.pallas import tpu as pltpu


# --------------------------------------------------------------------------- #
# Kernel
# --------------------------------------------------------------------------- #
def _gate_kernel(x0_ref, w1c_ref, b1_ref, w2_ref, b2_ref, o_ref):
    # x0 block: (bb, C) -- the t=0 slice of x for `bb` batch rows.
    x0 = x0_ref[...]                                                     # (bb, C)

    # ReLU(w1 @ (cos_c @ x0) + b1), with cos_c @ w1.T pre-folded into w1c_t.
    h = jnp.dot(x0, w1c_ref[...], preferred_element_type=jnp.float32)   # (bb, Csq)
    h = jnp.maximum(h + b1_ref[...], 0.0)

    # Sigmoid(w2 @ h + b2)
    g = jnp.dot(h, w2_ref[...], preferred_element_type=jnp.float32)     # (bb, C)
    o_ref[...] = jax.nn.sigmoid(g + b2_ref[...]).astype(o_ref.dtype)


# --------------------------------------------------------------------------- #
# Host-side constant folding (done ONCE per weight set)
# --------------------------------------------------------------------------- #
@lru_cache(maxsize=None)
def _cos_basis(C):
    # cos_c[k, c] = cos(2*pi*c*k / C); symmetric.  Built once per C.
    c = np.arange(C)
    ang = 2.0 * np.pi * np.outer(c, c) / C
    return np.cos(ang).astype(np.float32)


def fold_gate_params(w1, b1, w2, b2, param_dtype=jnp.float32):
    """Fold the cos basis through the first 1x1 conv.  Call once, reuse."""
    Csq, C = w1.shape
    cos_c = jnp.asarray(_cos_basis(C))                                   # (C, C)
    w1c_t = jnp.dot(cos_c, jnp.asarray(w1, jnp.float32).T)               # (C, Csq)
    w1c_t = w1c_t.astype(param_dtype)
    w2_t = jnp.asarray(w2, jnp.float32).T.astype(param_dtype)            # (Csq, C)
    b1_row = jnp.asarray(b1, jnp.float32).reshape(1, Csq)
    b2_row = jnp.asarray(b2, jnp.float32).reshape(1, C)
    return w1c_t, b1_row, w2_t, b2_row


# --------------------------------------------------------------------------- #
# Wrapper
# --------------------------------------------------------------------------- #
def _pick_block_b(B):
    if B <= 8:
        return B                      # single tiny block == full batch dim
    # >= 2 blocks (so v7x's two TensorCores both get work), multiple of 8,
    # capped at 512 rows per step.
    return min(512, 8 * pl.cdiv(pl.cdiv(B, 2), 8))


def _vmem_limit_bytes(block_b, C, Csq, x_itemsize, out_itemsize, w_itemsize):
    # Single-buffered weights/biases + double-buffered x0/out tiles, 2x slack.
    weights = (C * Csq + Csq * C) * w_itemsize + (Csq + C) * 4
    tiles = 2 * block_b * C * (x_itemsize + out_itemsize)
    need = 2 * (weights + tiles)
    return int(min(max(need, 4 * 1024 * 1024), 48 * 1024 * 1024))        # v7x-safe cap


@jax.jit
def gate_forward(x, w1c_t, b1_row, w2_t, b2_row):
    """x: (B, C, T); folded params from fold_gate_params.  Returns (B, C, 1)."""
    B, C, T = x.shape
    Csq = w1c_t.shape[1]
    out_dtype = x.dtype

    # Only the t=0 slice of x survives the avg-pool of the double FFT.
    # Under jit this strided gather fuses with the pallas_call input.
    x0 = x[:, :, 0]                                                      # (B, C)

    block_b = _pick_block_b(B)
    n_blk = pl.cdiv(B, block_b)

    def const(shape):
        # Grid-invariant operand: single-buffered (block index never changes).
        return pl.BlockSpec(shape, lambda i: (0,) * len(shape),
                            pipeline_mode=pl.Buffered(1))

    vmem_limit = _vmem_limit_bytes(
        block_b, C, Csq,
        jnp.dtype(x.dtype).itemsize,
        jnp.dtype(out_dtype).itemsize,
        jnp.dtype(w1c_t.dtype).itemsize)

    out2d = pl.pallas_call(
        _gate_kernel,
        out_shape=jax.ShapeDtypeStruct((B, C), out_dtype),
        grid=(n_blk,),
        in_specs=[
            pl.BlockSpec((block_b, C), lambda i: (i, 0)),                # x[:, :, 0]
            const((C, Csq)),                                             # cos_c @ w1.T
            const((1, Csq)),                                             # b1
            const((Csq, C)),                                             # w2.T
            const((1, C)),                                               # b2
        ],
        out_specs=pl.BlockSpec((block_b, C), lambda i: (i, 0)),
        compiler_params=pltpu.CompilerParams(
            dimension_semantics=("parallel",),
            vmem_limit_bytes=vmem_limit),
    )(x0, w1c_t, b1_row, w2_t, b2_row)

    return out2d.reshape(B, C, 1)                                        # metadata only


# --------------------------------------------------------------------------- #
# Pure-JAX reference (mirrors the PyTorch forward, full FFT path)
# --------------------------------------------------------------------------- #
def _reference(x, w1, b1, w2, b2):
    ori_dtype = x.dtype
    xf = x.astype(jnp.float32)
    y = jnp.fft.fft(xf, axis=-1)                          # fft over t
    y = jnp.transpose(y, (0, 2, 1))                       # b c t -> b t c
    y = jnp.real(jnp.fft.fft(y, axis=-1))                 # fft over c, real part
    y = jnp.transpose(y, (0, 2, 1)).astype(ori_dtype)     # b t c -> b c t
    pooled = jnp.mean(y.astype(jnp.float32), axis=-1, keepdims=True)     # (B, C, 1)
    h = jnp.maximum(jnp.einsum('oc,bci->boi', w1, pooled) + b1[None], 0.0)
    g = jax.nn.sigmoid(jnp.einsum('co,boi->bci', w2, h) + b2[None])
    return g.astype(ori_dtype)


if __name__ == "__main__":
    B, C, T = 2, 8, 16
    squeeze_rate = 2
    Csq = C // squeeze_rate

    key = jax.random.PRNGKey(0)
    kx, k1, k2, k3, k4 = jax.random.split(key, 5)

    x = jax.random.normal(kx, (B, C, T), dtype=jnp.float32)

    # "Conv1d(kernel_size=1)" parameters (a 1x1 conv is a channel matmul).
    w1 = 0.1 * jax.random.normal(k1, (Csq, C), dtype=jnp.float32)
    b1 = 0.1 * jax.random.normal(k2, (Csq, 1), dtype=jnp.float32)
    w2 = 0.1 * jax.random.normal(k3, (C, Csq), dtype=jnp.float32)
    b2 = 0.1 * jax.random.normal(k4, (C, 1), dtype=jnp.float32)

    params = fold_gate_params(w1, b1, w2, b2)       # folded once, reused per call
    out = gate_forward(x, *params)
    out = jax.block_until_ready(out)

    ref = _reference(x, w1, b1, w2, b2)
    assert out.shape == (B, C, 1), out.shape
    np.testing.assert_allclose(np.asarray(out), np.asarray(ref),
                               rtol=1e-4, atol=1e-4)

    print("KERNEL_OK")
</pallas_src>

<mosaic_0001>
module attributes {stable_mosaic.version = 11 : i64} {
  func.func @_gate_kernel(%arg0: i32, %arg1: memref<2x8xf32, #tpu.memory_space<vmem>>, %arg2: memref<8x4xf32, #tpu.memory_space<vmem>>, %arg3: memref<1x4xf32, #tpu.memory_space<vmem>>, %arg4: memref<4x8xf32, #tpu.memory_space<vmem>>, %arg5: memref<1x8xf32, #tpu.memory_space<vmem>>, %arg6: memref<2x8xf32, #tpu.memory_space<vmem>>) attributes {dimension_semantics = [#tpu.dimension_semantics<parallel>], iteration_bounds = array<i64: 1>, scalar_prefetch = 0 : i64, scratch_operands = 0 : i64, tpu.core_type = #tpu.core_type<tc>, window_params = [{transform_indices = @transform_0, window_bounds = array<i64: 2, 8>}, {pipeline_mode = #tpu.pipeline_mode<synchronous>, transform_indices = @transform_1, window_bounds = array<i64: 8, 4>}, {pipeline_mode = #tpu.pipeline_mode<synchronous>, transform_indices = @transform_2, window_bounds = array<i64: 1, 4>}, {pipeline_mode = #tpu.pipeline_mode<synchronous>, transform_indices = @transform_3, window_bounds = array<i64: 4, 8>}, {pipeline_mode = #tpu.pipeline_mode<synchronous>, transform_indices = @transform_4, window_bounds = array<i64: 1, 8>}, {transform_indices = @transform_5, window_bounds = array<i64: 2, 8>}]} {
    %c0 = arith.constant 0 : index
    %c0_0 = arith.constant 0 : index
    %0 = vector.load %arg1[%c0, %c0_0] : memref<2x8xf32, #tpu.memory_space<vmem>>, vector<2x8xf32>
    %c0_1 = arith.constant 0 : index
    %c0_2 = arith.constant 0 : index
    %1 = vector.load %arg2[%c0_1, %c0_2] : memref<8x4xf32, #tpu.memory_space<vmem>>, vector<8x4xf32>
    %cst = arith.constant dense<0.000000e+00> : vector<2x4xf32>
    %2 = tpu.matmul %0, %1, %cst {dimension_numbers = #tpu.dot_dimension_numbers<[1], [0], [0], [1], [0, 0, 1, 1], [], []>} : vector<2x8xf32>, vector<8x4xf32>, vector<2x4xf32> -> vector<2x4xf32>
    %c0_3 = arith.constant 0 : index
    %c0_4 = arith.constant 0 : index
    %3 = vector.load %arg3[%c0_3, %c0_4] : memref<1x4xf32, #tpu.memory_space<vmem>>, vector<1x4xf32>
    %4 = vector.broadcast %3 : vector<1x4xf32> to vector<2x4xf32>
    %5 = arith.addf %2, %4 : vector<2x4xf32>
    %cst_5 = arith.constant 0.000000e+00 : f32
    %6 = vector.broadcast %cst_5 : f32 to vector<2x4xf32>
    %7 = arith.maximumf %5, %6 : vector<2x4xf32>
    %c0_6 = arith.constant 0 : index
    %c0_7 = arith.constant 0 : index
    %8 = vector.load %arg4[%c0_6, %c0_7] : memref<4x8xf32, #tpu.memory_space<vmem>>, vector<4x8xf32>
    %cst_8 = arith.constant dense<0.000000e+00> : vector<2x8xf32>
    %9 = tpu.matmul %7, %8, %cst_8 {dimension_numbers = #tpu.dot_dimension_numbers<[1], [0], [0], [1], [0, 0, 1, 1], [], []>} : vector<2x4xf32>, vector<4x8xf32>, vector<2x8xf32> -> vector<2x8xf32>
    %c0_9 = arith.constant 0 : index
    %c0_10 = arith.constant 0 : index
    %10 = vector.load %arg5[%c0_9, %c0_10] : memref<1x8xf32, #tpu.memory_space<vmem>>, vector<1x8xf32>
    %11 = vector.broadcast %10 : vector<1x8xf32> to vector<2x8xf32>
    %12 = arith.addf %9, %11 : vector<2x8xf32>
    %13 = arith.negf %12 : vector<2x8xf32>
    %14 = math.exp %13 : vector<2x8xf32>
    %cst_11 = arith.constant 1.000000e+00 : f32
    %15 = vector.broadcast %cst_11 : f32 to vector<2x8xf32>
    %16 = arith.addf %15, %14 : vector<2x8xf32>
    %17 = arith.divf %15, %16 : vector<2x8xf32>
    %c0_12 = arith.constant 0 : index
    %c0_13 = arith.constant 0 : index
    %18 = vector.load %arg6[%c0_12, %c0_13] : memref<2x8xf32, #tpu.memory_space<vmem>>, vector<2x8xf32>
    tpu.vector_store %arg6[%c0_12, %c0_13], %17 {strides = array<i32>} : memref<2x8xf32, #tpu.memory_space<vmem>>, vector<2x8xf32>,
    return
  }
  func.func @transform_0(%arg0: i32) -> (i32, i32) {
    %c0_i32 = arith.constant 0 : i32
    %c0_i32_0 = arith.constant 0 : i32
    return %arg0, %c0_i32 : i32, i32
  }
  func.func @transform_1(%arg0: i32) -> (i32, i32) {
    %c0_i32 = arith.constant 0 : i32
    %c0_i32_0 = arith.constant 0 : i32
    %c0_i32_1 = arith.constant 0 : i32
    return %c0_i32, %c0_i32_0 : i32, i32
  }
  func.func @transform_2(%arg0: i32) -> (i32, i32) {
    %c0_i32 = arith.constant 0 : i32
    %c0_i32_0 = arith.constant 0 : i32
    %c0_i32_1 = arith.constant 0 : i32
    return %c0_i32, %c0_i32_0 : i32, i32
  }
  func.func @transform_3(%arg0: i32) -> (i32, i32) {
    %c0_i32 = arith.constant 0 : i32
    %c0_i32_0 = arith.constant 0 : i32
    %c0_i32_1 = arith.constant 0 : i32
    return %c0_i32, %c0_i32_0 : i32, i32
  }
  func.func @transform_4(%arg0: i32) -> (i32, i32) {
    %c0_i32 = arith.constant 0 : i32
    %c0_i32_0 = arith.constant 0 : i32
    %c0_i32_1 = arith.constant 0 : i32
    return %c0_i32, %c0_i32_0 : i32, i32
  }
  func.func @transform_5(%arg0: i32) -> (i32, i32) {
    %c0_i32 = arith.constant 0 : i32
    %c0_i32_0 = arith.constant 0 : i32
    return %arg0, %c0_i32 : i32, i32
  }
}

</mosaic_0001>

<llo_original>
// kernel: gate_forward.1
$region0: #{gate_forward.1}
  #allocation0 [shape = 'u32[]', space=smem, size = 0x4, offset = 0x4, fixed_abs, tag = 'smem constant byte address 0x4 - core index']
  #allocation1 [shape = 'u32[144,128]{1,0:T(1,128)}', space=vmem, size = 0x12000, scoped, tag = 'internal scratch']
  %s0 = inlined_call_operand.vmem [shape: f32[2,8], index: 0, kind: input, shape index: {}]
  %s1 = inlined_call_operand.vmem [shape: f32[8,4], index: 1, kind: input, shape index: {}]
  %s2 = inlined_call_operand.vmem [shape: f32[1,4], index: 2, kind: input, shape index: {}]
  %s3 = inlined_call_operand.vmem [shape: f32[4,8], index: 3, kind: input, shape index: {}]
  %s4 = inlined_call_operand.vmem [shape: f32[1,8], index: 4, kind: input, shape index: {}]
  %s5 = inlined_call_operand.hbm [shape: f32[2,8], index: 5, kind: output, shape index: {}]
  %s6 = sld [smem:[#allocation0]]
  $region30: #{gate_forward.1} parent=0
    _
  %s8 = ssub.s32 1, %s6
  %s9 = scalar_select 0, %s8, %s6
  $region1: #{gate_forward.1} parent=0
    #allocation2 [shape = 'u8[1024]{0}', space=vmem, size = 0x400, scoped, tag = 'output window, operand 0, single buffered']
    #allocation3 [shape = 's32[1]{0}', space=sflag, size = 0x4, scoped, tag = 'scoped memory for gate_forward.1']
    %10 = vsyncpa [#allocation3], 0
    // Predicated region
    $region2: #{gate_forward.1} parent=1 // pred_check
      _
    $region3: #{gate_forward.1} parent=1 // pred_check_branch
      %12 = sbr.rel (0) target = $region5
    $region4: #{gate_forward.1} parent=1 // pred_region
      _
    $region5: #{gate_forward.1} parent=1 // pred_fallthru
      _
    // Predicated region
    $region6: #{gate_forward.1} parent=1 // pred_check
      _
    $region7: #{gate_forward.1} parent=1 // pred_check_branch
      %14 = sbr.rel (0) target = $region9
    $region8: #{gate_forward.1} parent=1 // pred_region
      _
    $region9: #{gate_forward.1} parent=1 // pred_fallthru
      _
    // Predicated region
    $region10: #{gate_forward.1} parent=1 // pred_check
      _
    $region11: #{gate_forward.1} parent=1 // pred_check_branch
      %16 = sbr.rel (0) target = $region13
    $region12: #{gate_forward.1} parent=1 // pred_region
      _
    $region13: #{gate_forward.1} parent=1 // pred_fallthru
      _
    // Predicated region
    $region14: #{gate_forward.1} parent=1 // pred_check
      _
    $region15: #{gate_forward.1} parent=1 // pred_check_branch
      %18 = sbr.rel (0) target = $region17
    $region16: #{gate_forward.1} parent=1 // pred_region
      _
    $region17: #{gate_forward.1} parent=1 // pred_fallthru
      _
    // Predicated region
    $region18: #{gate_forward.1} parent=1 // pred_check
      _
    $region19: #{gate_forward.1} parent=1 // pred_check_branch
      %20 = sbr.rel (0) target = $region21
    $region20: #{gate_forward.1} parent=1 // pred_region
      _
    $region21: #{gate_forward.1} parent=1 // pred_fallthru
      _
    %v21 = vld [vmem:[%s0] sm:$0x3]
    %v22 = vld [vmem:[%s1] sm:$0xff]
    %v23 = vld [vmem:[%s2] sm:$0x1]
    %v25 = vlaneseq
    %v26 = vshrl.u32 %v25, 7
    %v27 = vsub.s32 0, %v26
    %v28 = vrot.slane %v23, %v27
    %vm30 = vcmask 64512
    %v32 = vsel %vm30, %v21, 0
    %34 = vmatprep.subr.mxu0 0.0
    %35 = vmatpush1.msra.mxu0 0.0
    %36 = vmatprep.subr.mxu0 0.0
    %37 = vmatpush1.msra.mxu0 0.0
    %38 = vmatprep.subr.mxu0 0.0
    %39 = vmatpush1.msra.mxu0 0.0
    %40 = vmatprep.subr.mxu0 0.0
    %41 = vmatpush1.msra.mxu0 0.0
    %42 = vmatprep.subr.mxu0 0.0
    %43 = vmatpush1.msra.mxu0 0.0
    %44 = vmatprep.subr.mxu0 0.0
    %45 = vmatpush1.msra.mxu0 0.0
    %46 = vmatprep.subr.mxu0 0.0
    %47 = vmatpush1.msra.mxu0 0.0
    %48 = vmatprep.subr.mxu0 0.0
    %49 = vmatpush1.msra.mxu0 0.0
    %50 = vmatprep.subr.mxu0 0.0
    %51 = vmatpush1.msra.mxu0 0.0
    %52 = vmatprep.subr.mxu0 0.0
    %53 = vmatpush1.msra.mxu0 0.0
    %54 = vmatprep.subr.mxu0 0.0
    %55 = vmatpush1.msra.mxu0 0.0
    %56 = vmatprep.subr.mxu0 0.0
    %57 = vmatpush1.msra.mxu0 0.0
    %58 = vmatprep.subr.mxu0 0.0
    %59 = vmatpush1.msra.mxu0 0.0
    %60 = vmatprep.subr.mxu0 0.0
    %61 = vmatpush1.msra.mxu0 0.0
    %62 = vmatprep.subr.mxu0 0.0
    %63 = vmatpush1.msra.mxu0 0.0
    %64 = vmatprep.subr.mxu0 0.0
    %65 = vmatpush1.msra.mxu0 %v22
    %66 = vmatprep.subr.mxu0 0.0
    %67 = vmatpush2.msra.mxu0 0.0
    %68 = vmatprep.subr.mxu0 0.0
    %69 = vmatpush2.msra.mxu0 0.0
    %70 = vmatprep.subr.mxu0 0.0
    %71 = vmatpush2.msra.mxu0 0.0
    %72 = vmatprep.subr.mxu0 0.0
    %73 = vmatpush2.msra.mxu0 0.0
    %74 = vmatprep.subr.mxu0 0.0
    %75 = vmatpush2.msra.mxu0 0.0
    %76 = vmatprep.subr.mxu0 0.0
    %77 = vmatpush2.msra.mxu0 0.0
    %78 = vmatprep.subr.mxu0 0.0
    %79 = vmatpush2.msra.mxu0 0.0
    %80 = vmatprep.subr.mxu0 0.0
    %81 = vmatpush2.msra.mxu0 0.0
    %82 = vmatprep.subr.mxu0 0.0
    %83 = vmatpush2.msra.mxu0 0.0
    %84 = vmatprep.subr.mxu0 0.0
    %85 = vmatpush2.msra.mxu0 0.0
    %86 = vmatprep.subr.mxu0 0.0
    %87 = vmatpush2.msra.mxu0 0.0
    %88 = vmatprep.subr.mxu0 0.0
    %89 = vmatpush2.msra.mxu0 0.0
    %90 = vmatprep.subr.mxu0 0.0
    %91 = vmatpush2.msra.mxu0 0.0
    %92 = vmatprep.subr.mxu0 0.0
    %93 = vmatpush2.msra.mxu0 0.0
    %94 = vmatprep.subr.mxu0 0.0
    %95 = vmatpush2.msra.mxu0 0.0
    %96 = vmatprep.subr.mxu0 0.0
    %97 = vmatpush2.msra.mxu0 0.0
    %98 = vmatprep.mubr.f32.mxu0 0.0
    %99 = vmatmul.mubr.f32.gmra.mxu0 %v32
    %v100 = vpop.f32.mrf.mxu0
    %v101 = vadd.f32 %v28, %v100
    %v102 = vpop.f32.mrf.mxu0
    %103 = vdwg.mxu0
    %v104 = vmax.f32 %v101, 0.0
    %v105 = vld [vmem:[%s3] sm:$0xf]
    %v106 = vld [vmem:[%s4] sm:$0x1]
    %v108 = vlaneseq
    %v109 = vshrl.u32 %v108, 7
    %v110 = vsub.s32 0, %v109
    %v111 = vrot.slane %v106, %v110
    %vm113 = vcmask 31744
    %v115 = vsel %vm113, %v104, 0
    %vm117 = vcmask 1043456
    %v119 = vsel %vm117, %v105, 0
    %121 = vmatprep.subr.mxu0 0.0
    %122 = vmatpush1.msra.mxu0 0.0
    %123 = vmatprep.subr.mxu0 0.0
    %124 = vmatpush1.msra.mxu0 0.0
    %125 = vmatprep.subr.mxu0 0.0
    %126 = vmatpush1.msra.mxu0 0.0
    %127 = vmatprep.subr.mxu0 0.0
    %128 = vmatpush1.msra.mxu0 0.0
    %129 = vmatprep.subr.mxu0 0.0
    %130 = vmatpush1.msra.mxu0 0.0
    %131 = vmatprep.subr.mxu0 0.0
    %132 = vmatpush1.msra.mxu0 0.0
    %133 = vmatprep.subr.mxu0 0.0
    %134 = vmatpush1.msra.mxu0 0.0
    %135 = vmatprep.subr.mxu0 0.0
    %136 = vmatpush1.msra.mxu0 0.0
    %137 = vmatprep.subr.mxu0 0.0
    %138 = vmatpush1.msra.mxu0 0.0
    %139 = vmatprep.subr.mxu0 0.0
    %140 = vmatpush1.msra.mxu0 0.0
    %141 = vmatprep.subr.mxu0 0.0
    %142 = vmatpush1.msra.mxu0 0.0
    %143 = vmatprep.subr.mxu0 0.0
    %144 = vmatpush1.msra.mxu0 0.0
    %145 = vmatprep.subr.mxu0 0.0
    %146 = vmatpush1.msra.mxu0 0.0
    %147 = vmatprep.subr.mxu0 0.0
    %148 = vmatpush1.msra.mxu0 0.0
    %149 = vmatprep.subr.mxu0 0.0
    %150 = vmatpush1.msra.mxu0 0.0
    %151 = vmatprep.subr.mxu0 0.0
    %152 = vmatpush1.msra.mxu0 %v119
    %153 = vmatprep.subr.mxu0 0.0
    %154 = vmatpush2.msra.mxu0 0.0
    %155 = vmatprep.subr.mxu0 0.0
    %156 = vmatpush2.msra.mxu0 0.0
    %157 = vmatprep.subr.mxu0 0.0
    %158 = vmatpush2.msra.mxu0 0.0
    %159 = vmatprep.subr.mxu0 0.0
    %160 = vmatpush2.msra.mxu0 0.0
    %161 = vmatprep.subr.mxu0 0.0
    %162 = vmatpush2.msra.mxu0 0.0
    %163 = vmatprep.subr.mxu0 0.0
    %164 = vmatpush2.msra.mxu0 0.0
    %165 = vmatprep.subr.mxu0 0.0
    %166 = vmatpush2.msra.mxu0 0.0
    %167 = vmatprep.subr.mxu0 0.0
    %168 = vmatpush2.msra.mxu0 0.0
    %169 = vmatprep.subr.mxu0 0.0
    %170 = vmatpush2.msra.mxu0 0.0
    %171 = vmatprep.subr.mxu0 0.0
    %172 = vmatpush2.msra.mxu0 0.0
    %173 = vmatprep.subr.mxu0 0.0
    %174 = vmatpush2.msra.mxu0 0.0
    %175 = vmatprep.subr.mxu0 0.0
    %176 = vmatpush2.msra.mxu0 0.0
    %177 = vmatprep.subr.mxu0 0.0
    %178 = vmatpush2.msra.mxu0 0.0
    %179 = vmatprep.subr.mxu0 0.0
    %180 = vmatpush2.msra.mxu0 0.0
    %181 = vmatprep.subr.mxu0 0.0
    %182 = vmatpush2.msra.mxu0 0.0
    %183 = vmatprep.subr.mxu0 0.0
    %184 = vmatpush2.msra.mxu0 0.0
    %185 = vmatprep.mubr.f32.mxu0 0.0
    %186 = vmatmul.mubr.f32.gmra.mxu0 %v115
    %v187 = vpop.f32.mrf.mxu0
    %v188 = vadd.f32 %v111, %v187
    %v189 = vpop.f32.mrf.mxu0
    %190 = vdwg.mxu0
    %v191 = vxor.u32 %v188, 2147483648
    %v192 = vmul.f32 %v191, 1.442695
    %v193 = vpow.pop %v192
    %v194 = vadd.f32 %v193, 1.0
    %v195 = vrcp.pop %v194
    %v196 = vmul.f32 1.0, %v195
    %vm197 = vcmask 58368
    %198 = vst.msk [vmem:[#allocation2] sm:$0x3] %vm197, %v196
    // Predicated region
    $region22: #{gate_forward.1} parent=1 // pred_check
      _
    $region23: #{gate_forward.1} parent=1 // pred_check_branch
      %200 = sbr.rel (0) target = $region25
    $region24: #{gate_forward.1} parent=1 // pred_region
      %s202 = ssub.s32 32, 32
      %203 = vsyncadd [#allocation3], %s202
      %s205 = sshll.u32 [#allocation2], 4
      %s206 = int_to_ptr.vmem [resolvable:$true] %s205
      %208 = dma.vmem_to_hbm [thread:$0]  %s206, 32, %s5, [#allocation3]
    $region25: #{gate_forward.1} parent=1 // pred_fallthru
      _
    // Predicated region
    $region26: #{gate_forward.1} parent=1 // pred_check
      _
    $region27: #{gate_forward.1} parent=1 // pred_check_branch
      %210 = sbr.rel (0) target = $region29
    $region28: #{gate_forward.1} parent=1 // pred_region
      %211 = dma.done [#allocation3], 32
    $region29: #{gate_forward.1} parent=1 // pred_fallthru
      _
    %212 = vsyncpa [#allocation3], 1

</llo_original>
